<compile_context>
chip_gen: v7x
topology: tpu7x:2x2x1
jax: 0.10.0
libtpu: 0.0.40
codegen_flags: <defaults>
</compile_context>

<pallas_src>
import jax
import jax.numpy as jnp
from jax.experimental import pallas as pl
from jax.experimental.pallas import tpu as pltpu


# ---------------------------------------------------------------------------
# Kernel A: resident weights.  One (f, g) layer pair fully fused per row tile.
#   out = x1 + FFN_g(x1),  x1 = x + FFN_f(x)
# ---------------------------------------------------------------------------
def _pair_resident_kernel(x_ref, w1s_ref, b1s_ref, w2s_ref, b2s_ref, o_ref):
    x = x_ref[...]                                   # (tm, Dp) native dtype
    x_f32 = x.astype(jnp.float32)

    def ffn(x_in, p):                                # p: 0 = f block, 1 = g block
        h = jnp.dot(x_in, w1s_ref[p], preferred_element_type=jnp.float32)
        # NOTE: jax.nn.gelu default is the tanh approximation (EUP-friendly);
        # PyTorch F.gelu default is exact erf — negligible difference here.
        h = jax.nn.gelu(h + b1s_ref[p].astype(jnp.float32))
        y = jnp.dot(h.astype(w2s_ref.dtype), w2s_ref[p],
                    preferred_element_type=jnp.float32)
        return y + b2s_ref[p].astype(jnp.float32)

    x1_f32 = x_f32 + ffn(x, 0)                       # residual kept in f32
    out_f32 = x1_f32 + ffn(x1_f32.astype(x.dtype), 1)
    o_ref[...] = out_f32.astype(o_ref.dtype)


# ---------------------------------------------------------------------------
# Kernel B: H-tiled.  Grid = (row tiles, phase{f,g}, H-chunks); weights are
# streamed in (Dp, tH) / (tH, Dp) slices so VMEM stays bounded (v7x 64 MiB).
# ---------------------------------------------------------------------------
def _pair_htiled_kernel(x_ref, w1_ref, b1_ref, w2_ref, b2_ref, o_ref,
                        res_ref, acc_ref):
    p = pl.program_id(1)        # 0 = f block, 1 = g block
    h = pl.program_id(2)        # H-chunk index
    nh = pl.num_programs(2)

    @pl.when(jnp.logical_and(p == 0, h == 0))
    def _():
        res_ref[...] = x_ref[...].astype(jnp.float32)     # residual stream (f32)

    @pl.when(h == 0)
    def _():
        # Start each phase's FFN output with its output bias (added exactly once).
        acc_ref[...] = jnp.broadcast_to(b2_ref[0].astype(jnp.float32),
                                        acc_ref.shape)

    x_in = res_ref[...].astype(x_ref.dtype)               # round only at the MXU input
    hid = jnp.dot(x_in, w1_ref[0], preferred_element_type=jnp.float32)
    hid = jax.nn.gelu(hid + b1_ref[0].astype(jnp.float32))
    acc_ref[...] += jnp.dot(hid.astype(w2_ref.dtype), w2_ref[0],
                            preferred_element_type=jnp.float32)

    @pl.when(h == nh - 1)
    def _():
        res_ref[...] = res_ref[...] + acc_ref[...]         # residual add (f32)

    @pl.when(jnp.logical_and(p == 1, h == nh - 1))
    def _():
        o_ref[...] = res_ref[...].astype(o_ref.dtype)


# ---------------------------------------------------------------------------
# Helpers
# ---------------------------------------------------------------------------
def _round_up(a, m):
    return ((a + m - 1) // m) * m


def _pad2d(a, rows, cols):
    pr, pc = rows - a.shape[0], cols - a.shape[1]
    if pr == 0 and pc == 0:
        return a
    return jnp.pad(a, ((0, pr), (0, pc)))


def _device_kind():
    try:
        return jax.devices()[0].device_kind.lower()
    except Exception:
        return ""


def _lane_pad_multiple():
    # v6e / v7x MXUs are 2x256x256 -> pad contraction/output dims to 256 there;
    # v5e's 128x128 MXU is native at 128.
    kind = _device_kind()
    if any(t in kind for t in ("v6", "v7", "7x")):
        return 256
    return 128


def _vmem_capacity_bytes():
    try:
        info = pltpu.get_tpu_info()
        for attr in ("vmem_capacity_bytes", "vmem_size_bytes", "vmem_bytes"):
            v = getattr(info, attr, None)
            if v:
                return int(v)
    except Exception:
        pass
    kind = _device_kind()
    if any(t in kind for t in ("v7", "7x")):
        return 64 << 20          # v7x: 64 MiB per TensorCore
    return 128 << 20             # v5e / v6e: 128 MiB


def _vmem_budget_bytes():
    cap = _vmem_capacity_bytes()
    return min(int(cap * 0.85), cap - (12 << 20))


# ---------------------------------------------------------------------------
# pallas_call wrappers
# ---------------------------------------------------------------------------
def _call_resident(x2d, w1s, b1s, w2s, b2s, *, tm, vmem_limit):
    Mp, Dp = x2d.shape
    Hp = w1s.shape[2]
    row = lambda i: (i, 0)
    const = lambda i: (0, 0, 0)

    def wspec(shape):
        # Constant block index across the whole grid: single-buffer the weights
        # (double-buffering a never-changing block is pure VMEM waste).
        return pl.BlockSpec(shape, const, pipeline_mode=pl.Buffered(1))

    return pl.pallas_call(
        _pair_resident_kernel,
        out_shape=jax.ShapeDtypeStruct((Mp, Dp), x2d.dtype),
        grid_spec=pltpu.PrefetchScalarGridSpec(
            num_scalar_prefetch=0,
            grid=(Mp // tm,),
            in_specs=[
                pl.BlockSpec((tm, Dp), row),   # x row tile (double-buffered)
                wspec((2, Dp, Hp)),            # stacked W1 (f, g)
                wspec((2, 1, Hp)),             # stacked b1
                wspec((2, Hp, Dp)),            # stacked W2
                wspec((2, 1, Dp)),             # stacked b2
            ],
            out_specs=pl.BlockSpec((tm, Dp), row),
        ),
        input_output_aliases={0: 0},           # output overwrites x in place
        compiler_params=pltpu.CompilerParams(
            dimension_semantics=("parallel",),
            vmem_limit_bytes=vmem_limit),
    )(x2d, w1s, b1s, w2s, b2s)


def _call_htiled(x2d, w1s, b1s, w2s, b2s, *, tm, vmem_limit, th_cap=None):
    Mp, Dp = x2d.shape
    Hp = w1s.shape[2]
    x_isz = jnp.dtype(x2d.dtype).itemsize
    w_isz = jnp.dtype(w1s.dtype).itemsize

    # Largest H chunk whose double-buffered weight slices + scratch fit VMEM.
    io = 2 * 2 * tm * Dp * x_isz                 # x/out row tiles, double-buffered
    scratch = 2 * tm * Dp * 4                    # res + acc (f32)
    fixed = io + scratch + 2 * 2 * Dp * w_isz + (4 << 20)
    per_th = 2 * (2 * Dp + 1) * w_isz + tm * 4   # W1 col + W2 row (x2 buf) + f32 hidden
    max_th = max(128, ((vmem_limit - fixed) // per_th) // 128 * 128)
    tH = min(max_th, Hp)
    if th_cap is not None:
        tH = min(tH, th_cap)
    tH = max(tH, 128)
    while Hp % tH:
        tH -= 128
    nh = Hp // tH

    return pl.pallas_call(
        _pair_htiled_kernel,
        out_shape=jax.ShapeDtypeStruct((Mp, Dp), x2d.dtype),
        grid_spec=pltpu.PrefetchScalarGridSpec(
            num_scalar_prefetch=0,
            grid=(Mp // tm, 2, nh),              # rows x phase{f,g} x H-chunks
            in_specs=[
                pl.BlockSpec((tm, Dp), lambda i, p, h: (i, 0)),
                pl.BlockSpec((1, Dp, tH), lambda i, p, h: (p, 0, h)),   # W1 cols
                pl.BlockSpec((1, 1, tH), lambda i, p, h: (p, 0, h)),    # b1 chunk
                pl.BlockSpec((1, tH, Dp), lambda i, p, h: (p, h, 0)),   # W2 rows
                pl.BlockSpec((1, 1, Dp), lambda i, p, h: (p, 0, 0)),    # b2
            ],
            out_specs=pl.BlockSpec((tm, Dp), lambda i, p, h: (i, 0)),
            scratch_shapes=[pltpu.VMEM((tm, Dp), jnp.float32),   # residual stream
                            pltpu.VMEM((tm, Dp), jnp.float32)],  # FFN accumulator
        ),
        input_output_aliases={0: 0},
        compiler_params=pltpu.CompilerParams(
            dimension_semantics=("parallel", "arbitrary", "arbitrary"),
            vmem_limit_bytes=vmem_limit),
    )(x2d, w1s, b1s, w2s, b2s)


def layer_pair_residual_ffn(x2d, w1s, b1s, w2s, b2s, *, tm, path="auto"):
    """One fused (f, g) layer pair over padded x2d of shape (Mp, Dp)."""
    Mp, Dp = x2d.shape
    Hp = w1s.shape[2]
    x_isz = jnp.dtype(x2d.dtype).itemsize
    w_isz = jnp.dtype(w1s.dtype).itemsize
    budget = _vmem_budget_bytes()

    # Footprint if both weight sets stay fully resident (single-buffered).
    weights = (4 * Dp * Hp + 2 * Hp + 2 * Dp) * w_isz
    io = 2 * 2 * tm * Dp * x_isz
    tmp = 2 * tm * Hp * 4 + 4 * tm * Dp * 4
    resident_need = weights + io + tmp + (4 << 20)

    if path == "resident" or (path == "auto" and resident_need <= budget):
        return _call_resident(x2d, w1s, b1s, w2s, b2s, tm=tm, vmem_limit=budget)
    # Forced "htiled" is only used for test coverage; keep chunks small there
    # so the multi-chunk accumulation path is actually exercised.
    th_cap = 128 if path == "htiled" else None
    return _call_htiled(x2d, w1s, b1s, w2s, b2s, tm=tm, vmem_limit=budget,
                        th_cap=th_cap)


# ---------------------------------------------------------------------------
# Parameter construction / preparation
# ---------------------------------------------------------------------------
def init_params(key, depth, dim, hidden, dtype=jnp.bfloat16):
    """Deterministic params for `depth` pairs of (f, g) FFN blocks."""
    params = []
    for d in range(depth):
        pair = []
        for which in range(2):  # f, g
            k = jax.random.fold_in(jax.random.fold_in(key, d), which)
            k1, k2 = jax.random.split(k)
            w1 = jax.random.normal(k1, (dim, hidden), dtype) * 0.02
            b1 = jnp.zeros((hidden,), dtype)
            w2 = jax.random.normal(k2, (hidden, dim), dtype) * 0.02
            b2 = jnp.zeros((dim,), dtype)
            pair.append((w1, b1, w2, b2))
        params.append(tuple(pair))
    return params


def prepare_params(params, pad_multiple=None):
    """Pad and stack the (f, g) FFN parameters ONCE, outside the forward path.
    Zero padding is exact for this block."""
    if pad_multiple is None:
        pad_multiple = _lane_pad_multiple()
    prepared = []
    for (f_p, g_p) in params:
        dim, hidden = f_p[0].shape
        Dp = _round_up(dim, pad_multiple)
        Hp = _round_up(hidden, pad_multiple)
        w1s = jnp.stack([_pad2d(p[0], Dp, Hp) for p in (f_p, g_p)])
        b1s = jnp.stack([_pad2d(p[1].reshape(1, -1), 1, Hp) for p in (f_p, g_p)])
        w2s = jnp.stack([_pad2d(p[2], Hp, Dp) for p in (f_p, g_p)])
        b2s = jnp.stack([_pad2d(p[3].reshape(1, -1), 1, Dp) for p in (f_p, g_p)])
        prepared.append((w1s, b1s, w2s, b2s))
    return prepared


# ---------------------------------------------------------------------------
# SequentialSequence.forward
# ---------------------------------------------------------------------------
def sequential_sequence_forward(x, prepared_params, *, tm=256, path="auto"):
    """Pallas implementation of SequentialSequence.forward.

    x: (B, N, D).  prepared_params: output of prepare_params().
    Returns (x_out, aux_loss) matching the PyTorch module.  args_route /
    layer_dropout are inference no-ops (training=False, synthetic layers take
    no routed kwargs)."""
    B, N, D = x.shape
    M = B * N
    Dp = prepared_params[0][0].shape[1]

    tm_eff = max(8, min(tm, _round_up(M, 8)))
    Mp = _round_up(M, tm_eff)
    x2d = _pad2d(x.reshape(M, D), Mp, Dp)

    aux_loss = jnp.zeros((1,), dtype=x.dtype)
    # TODO(synk): layers returning nonzero aux losses would accumulate into
    # aux_loss here; the synthetic FFN layers return plain tensors -> loss == 0.
    # TODO(synk): hide the per-layer weight DMA with a cross-pallas_call
    # prefetch future (P10) for small-M / decode-like shapes.
    for (w1s, b1s, w2s, b2s) in prepared_params:
        x2d = layer_pair_residual_ffn(x2d, w1s, b1s, w2s, b2s,
                                      tm=tm_eff, path=path)

    return x2d[:M, :D].reshape(B, N, D), aux_loss


# ---------------------------------------------------------------------------
# Plain-JAX reference mirroring the kernel's precision/cast points
# ---------------------------------------------------------------------------
def _reference_forward(x, params):
    B, N, D = x.shape
    x2d = x.reshape(B * N, D)
    for (f_p, g_p) in params:
        x_f32 = x2d.astype(jnp.float32)
        w1, b1, w2, b2 = f_p
        h = jax.nn.gelu(jnp.dot(x2d, w1, preferred_element_type=jnp.float32)
                        + b1.astype(jnp.float32))
        y = jnp.dot(h.astype(w2.dtype), w2, preferred_element_type=jnp.float32) \
            + b2.astype(jnp.float32)
        x1_f32 = x_f32 + y
        x1 = x1_f32.astype(x2d.dtype)
        w1, b1, w2, b2 = g_p
        h = jax.nn.gelu(jnp.dot(x1, w1, preferred_element_type=jnp.float32)
                        + b1.astype(jnp.float32))
        y = jnp.dot(h.astype(w2.dtype), w2, preferred_element_type=jnp.float32) \
            + b2.astype(jnp.float32)
        x2d = (x1_f32 + y).astype(x2d.dtype)
    return x2d.reshape(B, N, D)


if __name__ == "__main__":
    key = jax.random.PRNGKey(0)
    B, N, D, H = 2, 8, 32, 64
    depth = 2                      # number of (f, g) layer pairs
    dtype = jnp.bfloat16           # bf16 operands -> full-rate MXU; f32 accumulate

    kx, kp = jax.random.split(key)
    x = jax.random.normal(kx, (B, N, D), dtype)
    params = init_params(kp, depth, D, H, dtype)
    prepared = prepare_params(params)          # pad + stack weights once

    fwd = jax.jit(sequential_sequence_forward, static_argnames=("tm", "path"))

    out, aux_loss = fwd(x, prepared)           # auto -> resident-weights path
    out = jax.block_until_ready(out)
    aux_loss = jax.block_until_ready(aux_loss)

    out_ht, _ = fwd(x, prepared, path="htiled")   # exercise the H-tiled path too
    out_ht = jax.block_until_ready(out_ht)

    ref = _reference_forward(x, params)
    assert out.shape == (B, N, D)
    assert aux_loss.shape == (1,)
    assert jnp.allclose(out.astype(jnp.float32), ref.astype(jnp.float32),
                        atol=2e-2, rtol=2e-2)
    assert jnp.allclose(out_ht.astype(jnp.float32), ref.astype(jnp.float32),
                        atol=2e-2, rtol=2e-2)
    assert jnp.all(aux_loss == 0.0)

    print("KERNEL_OK")
</pallas_src>

<mosaic_0001>
module attributes {stable_mosaic.version = 11 : i64} {
  func.func @_pair_resident_kernel(%arg0: i32, %arg1: memref<16x128xbf16, #tpu.memory_space<vmem>>, %arg2: memref<2x128x128xbf16, #tpu.memory_space<vmem>>, %arg3: memref<2x1x128xbf16, #tpu.memory_space<vmem>>, %arg4: memref<2x128x128xbf16, #tpu.memory_space<vmem>>, %arg5: memref<2x1x128xbf16, #tpu.memory_space<vmem>>, %arg6: memref<16x128xbf16, #tpu.memory_space<vmem>>) attributes {dimension_semantics = [#tpu.dimension_semantics<parallel>], iteration_bounds = array<i64: 1>, scalar_prefetch = 0 : i64, scratch_operands = 0 : i64, tpu.core_type = #tpu.core_type<tc>, window_params = [{transform_indices = @transform_0, window_bounds = array<i64: 16, 128>}, {pipeline_mode = #tpu.pipeline_mode<synchronous>, transform_indices = @transform_1, window_bounds = array<i64: 2, 128, 128>}, {pipeline_mode = #tpu.pipeline_mode<synchronous>, transform_indices = @transform_2, window_bounds = array<i64: 2, 1, 128>}, {pipeline_mode = #tpu.pipeline_mode<synchronous>, transform_indices = @transform_3, window_bounds = array<i64: 2, 128, 128>}, {pipeline_mode = #tpu.pipeline_mode<synchronous>, transform_indices = @transform_4, window_bounds = array<i64: 2, 1, 128>}, {transform_indices = @transform_5, window_bounds = array<i64: 16, 128>}]} {
    %c0 = arith.constant 0 : index
    %c0_0 = arith.constant 0 : index
    %0 = vector.load %arg1[%c0, %c0_0] : memref<16x128xbf16, #tpu.memory_space<vmem>>, vector<16x128xbf16>
    %1 = arith.extf %0 : vector<16x128xbf16> to vector<16x128xf32>
    %c0_1 = arith.constant 0 : index
    %c0_2 = arith.constant 0 : index
    %c0_3 = arith.constant 0 : index
    %2 = vector.load %arg2[%c0_1, %c0_2, %c0_3] : memref<2x128x128xbf16, #tpu.memory_space<vmem>>, vector<1x128x128xbf16>
    %3 = vector.shape_cast %2 : vector<1x128x128xbf16> to vector<128x128xbf16>
    %cst = arith.constant dense<0.000000e+00> : vector<16x128xf32>
    %4 = tpu.matmul %0, %3, %cst {dimension_numbers = #tpu.dot_dimension_numbers<[1], [0], [0], [1], [0, 0, 1, 1], [], []>} : vector<16x128xbf16>, vector<128x128xbf16>, vector<16x128xf32> -> vector<16x128xf32>
    %c0_4 = arith.constant 0 : index
    %c0_5 = arith.constant 0 : index
    %c0_6 = arith.constant 0 : index
    %5 = vector.load %arg3[%c0_4, %c0_5, %c0_6] : memref<2x1x128xbf16, #tpu.memory_space<vmem>>, vector<1x1x128xbf16>
    %6 = vector.shape_cast %5 : vector<1x1x128xbf16> to vector<1x128xbf16>
    %7 = arith.extf %6 : vector<1x128xbf16> to vector<1x128xf32>
    %8 = vector.broadcast %7 : vector<1x128xf32> to vector<16x128xf32>
    %9 = arith.addf %4, %8 : vector<16x128xf32>
    %10 = arith.mulf %9, %9 : vector<16x128xf32>
    %11 = arith.mulf %9, %10 : vector<16x128xf32>
    %cst_7 = arith.constant 4.471500e-02 : f32
    %12 = vector.broadcast %cst_7 : f32 to vector<16x128xf32>
    %13 = arith.mulf %12, %11 : vector<16x128xf32>
    %14 = arith.addf %9, %13 : vector<16x128xf32>
    %cst_8 = arith.constant 0.797884583 : f32
    %15 = vector.broadcast %cst_8 : f32 to vector<16x128xf32>
    %16 = arith.mulf %15, %14 : vector<16x128xf32>
    %17 = math.tanh %16 : vector<16x128xf32>
    %cst_9 = arith.constant 1.000000e+00 : f32
    %18 = vector.broadcast %cst_9 : f32 to vector<16x128xf32>
    %19 = arith.addf %18, %17 : vector<16x128xf32>
    %cst_10 = arith.constant 5.000000e-01 : f32
    %20 = vector.broadcast %cst_10 : f32 to vector<16x128xf32>
    %21 = arith.mulf %20, %19 : vector<16x128xf32>
    %22 = arith.mulf %9, %21 : vector<16x128xf32>
    %23 = arith.truncf %22 : vector<16x128xf32> to vector<16x128xbf16>
    %c0_11 = arith.constant 0 : index
    %c0_12 = arith.constant 0 : index
    %c0_13 = arith.constant 0 : index
    %24 = vector.load %arg4[%c0_11, %c0_12, %c0_13] : memref<2x128x128xbf16, #tpu.memory_space<vmem>>, vector<1x128x128xbf16>
    %25 = vector.shape_cast %24 : vector<1x128x128xbf16> to vector<128x128xbf16>
    %cst_14 = arith.constant dense<0.000000e+00> : vector<16x128xf32>
    %26 = tpu.matmul %23, %25, %cst_14 {dimension_numbers = #tpu.dot_dimension_numbers<[1], [0], [0], [1], [0, 0, 1, 1], [], []>} : vector<16x128xbf16>, vector<128x128xbf16>, vector<16x128xf32> -> vector<16x128xf32>
    %c0_15 = arith.constant 0 : index
    %c0_16 = arith.constant 0 : index
    %c0_17 = arith.constant 0 : index
    %27 = vector.load %arg5[%c0_15, %c0_16, %c0_17] : memref<2x1x128xbf16, #tpu.memory_space<vmem>>, vector<1x1x128xbf16>
    %28 = vector.shape_cast %27 : vector<1x1x128xbf16> to vector<1x128xbf16>
    %29 = arith.extf %28 : vector<1x128xbf16> to vector<1x128xf32>
    %30 = vector.broadcast %29 : vector<1x128xf32> to vector<16x128xf32>
    %31 = arith.addf %26, %30 : vector<16x128xf32>
    %32 = arith.addf %1, %31 : vector<16x128xf32>
    %33 = arith.truncf %32 : vector<16x128xf32> to vector<16x128xbf16>
    %c1 = arith.constant 1 : index
    %c0_18 = arith.constant 0 : index
    %c0_19 = arith.constant 0 : index
    %34 = vector.load %arg2[%c1, %c0_18, %c0_19] : memref<2x128x128xbf16, #tpu.memory_space<vmem>>, vector<1x128x128xbf16>
    %35 = vector.shape_cast %34 : vector<1x128x128xbf16> to vector<128x128xbf16>
    %cst_20 = arith.constant dense<0.000000e+00> : vector<16x128xf32>
    %36 = tpu.matmul %33, %35, %cst_20 {dimension_numbers = #tpu.dot_dimension_numbers<[1], [0], [0], [1], [0, 0, 1, 1], [], []>} : vector<16x128xbf16>, vector<128x128xbf16>, vector<16x128xf32> -> vector<16x128xf32>
    %c1_21 = arith.constant 1 : index
    %c0_22 = arith.constant 0 : index
    %c0_23 = arith.constant 0 : index
    %37 = vector.load %arg3[%c1_21, %c0_22, %c0_23] : memref<2x1x128xbf16, #tpu.memory_space<vmem>>, vector<1x1x128xbf16>
    %38 = vector.shape_cast %37 : vector<1x1x128xbf16> to vector<1x128xbf16>
    %39 = arith.extf %38 : vector<1x128xbf16> to vector<1x128xf32>
    %40 = vector.broadcast %39 : vector<1x128xf32> to vector<16x128xf32>
    %41 = arith.addf %36, %40 : vector<16x128xf32>
    %42 = arith.mulf %41, %41 : vector<16x128xf32>
    %43 = arith.mulf %41, %42 : vector<16x128xf32>
    %cst_24 = arith.constant 4.471500e-02 : f32
    %44 = vector.broadcast %cst_24 : f32 to vector<16x128xf32>
    %45 = arith.mulf %44, %43 : vector<16x128xf32>
    %46 = arith.addf %41, %45 : vector<16x128xf32>
    %cst_25 = arith.constant 0.797884583 : f32
    %47 = vector.broadcast %cst_25 : f32 to vector<16x128xf32>
    %48 = arith.mulf %47, %46 : vector<16x128xf32>
    %49 = math.tanh %48 : vector<16x128xf32>
    %cst_26 = arith.constant 1.000000e+00 : f32
    %50 = vector.broadcast %cst_26 : f32 to vector<16x128xf32>
    %51 = arith.addf %50, %49 : vector<16x128xf32>
    %cst_27 = arith.constant 5.000000e-01 : f32
    %52 = vector.broadcast %cst_27 : f32 to vector<16x128xf32>
    %53 = arith.mulf %52, %51 : vector<16x128xf32>
    %54 = arith.mulf %41, %53 : vector<16x128xf32>
    %55 = arith.truncf %54 : vector<16x128xf32> to vector<16x128xbf16>
    %c1_28 = arith.constant 1 : index
    %c0_29 = arith.constant 0 : index
    %c0_30 = arith.constant 0 : index
    %56 = vector.load %arg4[%c1_28, %c0_29, %c0_30] : memref<2x128x128xbf16, #tpu.memory_space<vmem>>, vector<1x128x128xbf16>
    %57 = vector.shape_cast %56 : vector<1x128x128xbf16> to vector<128x128xbf16>
    %cst_31 = arith.constant dense<0.000000e+00> : vector<16x128xf32>
    %58 = tpu.matmul %55, %57, %cst_31 {dimension_numbers = #tpu.dot_dimension_numbers<[1], [0], [0], [1], [0, 0, 1, 1], [], []>} : vector<16x128xbf16>, vector<128x128xbf16>, vector<16x128xf32> -> vector<16x128xf32>
    %c1_32 = arith.constant 1 : index
    %c0_33 = arith.constant 0 : index
    %c0_34 = arith.constant 0 : index
    %59 = vector.load %arg5[%c1_32, %c0_33, %c0_34] : memref<2x1x128xbf16, #tpu.memory_space<vmem>>, vector<1x1x128xbf16>
    %60 = vector.shape_cast %59 : vector<1x1x128xbf16> to vector<1x128xbf16>
    %61 = arith.extf %60 : vector<1x128xbf16> to vector<1x128xf32>
    %62 = vector.broadcast %61 : vector<1x128xf32> to vector<16x128xf32>
    %63 = arith.addf %58, %62 : vector<16x128xf32>
    %64 = arith.addf %32, %63 : vector<16x128xf32>
    %65 = arith.truncf %64 : vector<16x128xf32> to vector<16x128xbf16>
    %c0_35 = arith.constant 0 : index
    %c0_36 = arith.constant 0 : index
    %66 = vector.load %arg6[%c0_35, %c0_36] : memref<16x128xbf16, #tpu.memory_space<vmem>>, vector<16x128xbf16>
    tpu.vector_store %arg6[%c0_35, %c0_36], %65 {strides = array<i32>} : memref<16x128xbf16, #tpu.memory_space<vmem>>, vector<16x128xbf16>,
    return
  }
  func.func @transform_0(%arg0: i32) -> (i32, i32) {
    %c0_i32 = arith.constant 0 : i32
    %c0_i32_0 = arith.constant 0 : i32
    return %arg0, %c0_i32 : i32, i32
  }
  func.func @transform_1(%arg0: i32) -> (i32, i32, i32) {
    %c0_i32 = arith.constant 0 : i32
    %c0_i32_0 = arith.constant 0 : i32
    %c0_i32_1 = arith.constant 0 : i32
    %c0_i32_2 = arith.constant 0 : i32
    return %c0_i32, %c0_i32_0, %c0_i32_1 : i32, i32, i32
  }
  func.func @transform_2(%arg0: i32) -> (i32, i32, i32) {
    %c0_i32 = arith.constant 0 : i32
    %c0_i32_0 = arith.constant 0 : i32
    %c0_i32_1 = arith.constant 0 : i32
    %c0_i32_2 = arith.constant 0 : i32
    return %c0_i32, %c0_i32_0, %c0_i32_1 : i32, i32, i32
  }
  func.func @transform_3(%arg0: i32) -> (i32, i32, i32) {
    %c0_i32 = arith.constant 0 : i32
    %c0_i32_0 = arith.constant 0 : i32
    %c0_i32_1 = arith.constant 0 : i32
    %c0_i32_2 = arith.constant 0 : i32
    return %c0_i32, %c0_i32_0, %c0_i32_1 : i32, i32, i32
  }
  func.func @transform_4(%arg0: i32) -> (i32, i32, i32) {
    %c0_i32 = arith.constant 0 : i32
    %c0_i32_0 = arith.constant 0 : i32
    %c0_i32_1 = arith.constant 0 : i32
    %c0_i32_2 = arith.constant 0 : i32
    return %c0_i32, %c0_i32_0, %c0_i32_1 : i32, i32, i32
  }
  func.func @transform_5(%arg0: i32) -> (i32, i32) {
    %c0_i32 = arith.constant 0 : i32
    %c0_i32_0 = arith.constant 0 : i32
    return %arg0, %c0_i32 : i32, i32
  }
}

</mosaic_0001>

<llo_original>
// kernel: sequential_sequence_forward.2
$region0: #{sequential_sequence_forward.2}
  #allocation0 [shape = 'u32[]', space=smem, size = 0x4, offset = 0x4, fixed_abs, tag = 'smem constant byte address 0x4 - core index']
  #allocation1 [shape = 'u32[144,128]{1,0:T(1,128)}', space=vmem, size = 0x12000, scoped, tag = 'internal scratch']
  %s0 = inlined_call_operand.hbm [shape: bf16[16,128], index: 0, kind: input, shape index: {}, may-alias: {0,5}]
  %s1 = inlined_call_operand.hbm [shape: bf16[2,128,128], index: 1, kind: input, shape index: {}]
  %s2 = inlined_call_operand.hbm [shape: bf16[2,1,128], index: 2, kind: input, shape index: {}]
  %s3 = inlined_call_operand.hbm [shape: bf16[2,128,128], index: 3, kind: input, shape index: {}]
  %s4 = inlined_call_operand.hbm [shape: bf16[2,1,128], index: 4, kind: input, shape index: {}]
  %s5 = inlined_call_operand.hbm [shape: bf16[16,128], index: 5, kind: output, shape index: {}, may-alias: {0,5}]
  %s6 = sld [smem:[#allocation0]]
  $region50: #{sequential_sequence_forward.2} parent=0
    _
  %s8 = ssub.s32 1, %s6
  %s9 = scalar_select 0, %s8, %s6
  $region1: #{sequential_sequence_forward.2} parent=0
    #allocation2 [shape = 'u8[4096]{0}', space=vmem, size = 0x1000, scoped, tag = 'input window, operand 0, single buffered']
    #allocation3 [shape = 's32[1]{0}', space=sflag, size = 0x4, scoped, tag = 'scoped memory for sequential_sequence_forward.2']
    #allocation4 [shape = 's32[1]{0}', space=sflag, size = 0x4, scoped, tag = 'scoped memory for sequential_sequence_forward.2']
    #allocation5 [shape = 'u8[65536]{0}', space=vmem, size = 0x10000, scoped, tag = 'input window, operand 1, single buffered']
    #allocation6 [shape = 's32[1]{0}', space=sflag, size = 0x4, scoped, tag = 'scoped memory for sequential_sequence_forward.2']
    #allocation7 [shape = 'u8[1024]{0}', space=vmem, size = 0x400, scoped, tag = 'input window, operand 2, single buffered']
    #allocation8 [shape = 'u8[65536]{0}', space=vmem, size = 0x10000, scoped, tag = 'input window, operand 3, single buffered']
    #allocation9 [shape = 's32[1]{0}', space=sflag, size = 0x4, scoped, tag = 'scoped memory for sequential_sequence_forward.2']
    #allocation10 [shape = 'u8[1024]{0}', space=vmem, size = 0x400, scoped, tag = 'input window, operand 4, single buffered']
    #allocation11 [shape = 'u8[4096]{0}', space=vmem, size = 0x1000, scoped, tag = 'output window, operand 0, single buffered']
    %10 = vsyncpa [#allocation3], 0
    %11 = vsyncpa [#allocation6], 0
    %12 = vsyncpa [#allocation9], 0
    %13 = vsyncpa [#allocation4], 0
    // Predicated region
    $region2: #{sequential_sequence_forward.2} parent=1 // pred_check
      _
    $region3: #{sequential_sequence_forward.2} parent=1 // pred_check_branch
      %15 = sbr.rel (0) target = $region5
    $region4: #{sequential_sequence_forward.2} parent=1 // pred_region
      %s17 = ssub.s32 128, 128
      %18 = vsyncadd [#allocation3], %s17
      %s19 = sshll.u32 [#allocation2], 4
      %s20 = int_to_ptr.vmem [resolvable:$true] %s19
      %25 = dma.hbm_to_vmem [thread:$0]  %s0, 128, %s20, [#allocation3], 64, 64, 4
    $region5: #{sequential_sequence_forward.2} parent=1 // pred_fallthru
      _
    // Predicated region
    $region6: #{sequential_sequence_forward.2} parent=1 // pred_check
      _
    $region7: #{sequential_sequence_forward.2} parent=1 // pred_check_branch
      %27 = sbr.rel (0) target = $region9
    $region8: #{sequential_sequence_forward.2} parent=1 // pred_region
      %s29 = ssub.s32 2048, 2048
      %30 = vsyncadd [#allocation6], %s29
      %s31 = sshll.u32 [#allocation5], 4
      %s32 = int_to_ptr.vmem [resolvable:$true] %s31
      %37 = dma.hbm_to_vmem [thread:$0]  %s1, 2048, %s32, [#allocation6], 64, 64, 4
    $region9: #{sequential_sequence_forward.2} parent=1 // pred_fallthru
      _
    // Predicated region
    $region10: #{sequential_sequence_forward.2} parent=1 // pred_check
      _
    $region11: #{sequential_sequence_forward.2} parent=1 // pred_check_branch
      %39 = sbr.rel (0) target = $region13
    $region12: #{sequential_sequence_forward.2} parent=1 // pred_region
      %s41 = ssub.s32 32, 32
      %42 = vsyncadd [#allocation6], %s41
      %s43 = sshll.u32 [#allocation7], 4
      %s44 = int_to_ptr.vmem [resolvable:$true] %s43
      %49 = dma.hbm_to_vmem [thread:$0]  %s2, 32, %s44, [#allocation6], 16, 16, 1
    $region13: #{sequential_sequence_forward.2} parent=1 // pred_fallthru
      _
    // Predicated region
    $region14: #{sequential_sequence_forward.2} parent=1 // pred_check
      _
    $region15: #{sequential_sequence_forward.2} parent=1 // pred_check_branch
      %51 = sbr.rel (0) target = $region17
    $region16: #{sequential_sequence_forward.2} parent=1 // pred_region
      %s53 = ssub.s32 2048, 2048
      %54 = vsyncadd [#allocation9], %s53
      %s55 = sshll.u32 [#allocation8], 4
      %s56 = int_to_ptr.vmem [resolvable:$true] %s55
      %61 = dma.hbm_to_vmem [thread:$0]  %s3, 2048, %s56, [#allocation9], 64, 64, 4
    $region17: #{sequential_sequence_forward.2} parent=1 // pred_fallthru
      _
    // Predicated region
    $region18: #{sequential_sequence_forward.2} parent=1 // pred_check
      _
    $region19: #{sequential_sequence_forward.2} parent=1 // pred_check_branch
      %63 = sbr.rel (0) target = $region21
    $region20: #{sequential_sequence_forward.2} parent=1 // pred_region
      %s65 = ssub.s32 32, 32
      %66 = vsyncadd [#allocation9], %s65
      %s67 = sshll.u32 [#allocation10], 4
      %s68 = int_to_ptr.vmem [resolvable:$true] %s67
      %73 = dma.hbm_to_vmem [thread:$0]  %s4, 32, %s68, [#allocation9], 16, 16, 1
    $region21: #{sequential_sequence_forward.2} parent=1 // pred_fallthru
      _
    // Predicated region
    $region22: #{sequential_sequence_forward.2} parent=1 // pred_check
      _
    $region23: #{sequential_sequence_forward.2} parent=1 // pred_check_branch
      %75 = sbr.rel (0) target = $region25
    $region24: #{sequential_sequence_forward.2} parent=1 // pred_region
      %76 = dma.done [#allocation3], 128
    $region25: #{sequential_sequence_forward.2} parent=1 // pred_fallthru
      _
    // Predicated region
    $region26: #{sequential_sequence_forward.2} parent=1 // pred_check
      _
    $region27: #{sequential_sequence_forward.2} parent=1 // pred_check_branch
      %78 = sbr.rel (0) target = $region29
    $region28: #{sequential_sequence_forward.2} parent=1 // pred_region
      %79 = dma.done [#allocation6], 2048
    $region29: #{sequential_sequence_forward.2} parent=1 // pred_fallthru
      _
    // Predicated region
    $region30: #{sequential_sequence_forward.2} parent=1 // pred_check
      _
    $region31: #{sequential_sequence_forward.2} parent=1 // pred_check_branch
      %81 = sbr.rel (0) target = $region33
    $region32: #{sequential_sequence_forward.2} parent=1 // pred_region
      %82 = dma.done [#allocation6], 32
    $region33: #{sequential_sequence_forward.2} parent=1 // pred_fallthru
      _
    // Predicated region
    $region34: #{sequential_sequence_forward.2} parent=1 // pred_check
      _
    $region35: #{sequential_sequence_forward.2} parent=1 // pred_check_branch
      %84 = sbr.rel (0) target = $region37
    $region36: #{sequential_sequence_forward.2} parent=1 // pred_region
      %85 = dma.done [#allocation9], 2048
    $region37: #{sequential_sequence_forward.2} parent=1 // pred_fallthru
      _
    // Predicated region
    $region38: #{sequential_sequence_forward.2} parent=1 // pred_check
      _
    $region39: #{sequential_sequence_forward.2} parent=1 // pred_check_branch
      %87 = sbr.rel (0) target = $region41
    $region40: #{sequential_sequence_forward.2} parent=1 // pred_region
      %88 = dma.done [#allocation9], 32
    $region41: #{sequential_sequence_forward.2} parent=1 // pred_fallthru
      _
    %v90 = vld [vmem:[#allocation2] sm:$0xf]
    %v91 = vld [vmem:[#allocation2 + $0x4] sm:$0xf]
    %v92 = vunpack.c.l.bf16 %v90
    %v93 = vunpack.c.l.bf16 %v91
    %v94 = vld [vmem:[#allocation5] sm:$0xf]
    %v95 = vld [vmem:[#allocation5 + $0x4] sm:$0xf]
    %v96 = vld [vmem:[#allocation5 + $0x8] sm:$0xf]
    %v97 = vld [vmem:[#allocation5 + $0xc] sm:$0xf]
    %v98 = vld [vmem:[#allocation5 + $0x10] sm:$0xf]
    %v99 = vld [vmem:[#allocation5 + $0x14] sm:$0xf]
    %v100 = vld [vmem:[#allocation5 + $0x18] sm:$0xf]
    %v101 = vld [vmem:[#allocation5 + $0x1c] sm:$0xf]
    %v102 = vld [vmem:[#allocation5 + $0x20] sm:$0xf]
    %v103 = vld [vmem:[#allocation5 + $0x24] sm:$0xf]
    %v104 = vld [vmem:[#allocation5 + $0x28] sm:$0xf]
    %v105 = vld [vmem:[#allocation5 + $0x2c] sm:$0xf]
    %v106 = vld [vmem:[#allocation5 + $0x30] sm:$0xf]
    %v107 = vld [vmem:[#allocation5 + $0x34] sm:$0xf]
    %v108 = vld [vmem:[#allocation5 + $0x38] sm:$0xf]
    %v109 = vld [vmem:[#allocation5 + $0x3c] sm:$0xf]
    %v110 = vld [vmem:[#allocation7] sm:$0x1]
    %v111 = vunpack.c.l.bf16 %v110
    %v112 = vlaneseq
    %v113 = vshrl.u32 %v112, 7
    %v114 = vsub.s32 0, %v113
    %v115 = vrot.slane %v111, %v114
    %v118 = vunpack.c.l.b16 %v90
    %v119 = vunpack.c.l.b16 %v91
    %v120 = vpack.c.b16 %v119, %v118
    %v138 = vunpack.c.l.b16 %v94
    %v139 = vunpack.c.l.b16 %v95
    %v140 = vunpack.c.l.b16 %v96
    %v141 = vunpack.c.l.b16 %v97
    %v142 = vunpack.c.l.b16 %v98
    %v143 = vunpack.c.l.b16 %v99
    %v144 = vunpack.c.l.b16 %v100
    %v145 = vunpack.c.l.b16 %v101
    %v146 = vunpack.c.l.b16 %v102
    %v147 = vunpack.c.l.b16 %v103
    %v148 = vunpack.c.l.b16 %v104
    %v149 = vunpack.c.l.b16 %v105
    %v150 = vunpack.c.l.b16 %v106
    %v151 = vunpack.c.l.b16 %v107
    %v152 = vunpack.c.l.b16 %v108
    %v153 = vunpack.c.l.b16 %v109
    %v154 = vpack.c.b16 %v139, %v138
    %v155 = vpack.c.b16 %v141, %v140
    %v156 = vpack.c.b16 %v143, %v142
    %v157 = vpack.c.b16 %v145, %v144
    %v158 = vpack.c.b16 %v147, %v146
    %v159 = vpack.c.b16 %v149, %v148
    %v160 = vpack.c.b16 %v151, %v150
    %v161 = vpack.c.b16 %v153, %v152
    %170 = vmatprep.subr.bf16.mxu0 0
    %171 = vmatpush1.bf16.msra.mxu0 %v154
    %172 = vmatprep.subr.bf16.mxu0 0
    %173 = vmatpush1.bf16.msra.mxu0 %v155
    %174 = vmatprep.subr.bf16.mxu0 0
    %175 = vmatpush1.bf16.msra.mxu0 %v156
    %176 = vmatprep.subr.bf16.mxu0 0
    %177 = vmatpush1.bf16.msra.mxu0 %v157
    %178 = vmatprep.subr.bf16.mxu0 0
    %179 = vmatpush1.bf16.msra.mxu0 %v158
    %180 = vmatprep.subr.bf16.mxu0 0
    %181 = vmatpush1.bf16.msra.mxu0 %v159
    %182 = vmatprep.subr.bf16.mxu0 0
    %183 = vmatpush1.bf16.msra.mxu0 %v160
    %184 = vmatprep.subr.bf16.mxu0 0
    %185 = vmatpush1.bf16.msra.mxu0 %v161
    %186 = vmatprep.subr.bf16.mxu0 0
    %187 = vmatpush1.bf16.msra.mxu0 0
    %188 = vmatprep.subr.bf16.mxu0 0
    %189 = vmatpush1.bf16.msra.mxu0 0
    %190 = vmatprep.subr.bf16.mxu0 0
    %191 = vmatpush1.bf16.msra.mxu0 0
    %192 = vmatprep.subr.bf16.mxu0 0
    %193 = vmatpush1.bf16.msra.mxu0 0
    %194 = vmatprep.subr.bf16.mxu0 0
    %195 = vmatpush1.bf16.msra.mxu0 0
    %196 = vmatprep.subr.bf16.mxu0 0
    %197 = vmatpush1.bf16.msra.mxu0 0
    %198 = vmatprep.subr.bf16.mxu0 0
    %199 = vmatpush1.bf16.msra.mxu0 0
    %200 = vmatprep.subr.bf16.mxu0 0
    %201 = vmatpush1.bf16.msra.mxu0 0
    %202 = vmatprep.mubr.bf16.mxu0 0
    %203 = vmatmul.mubr.bf16.gmra.mrb[0].mxu0 %v120
    %v204 = vpop.f32.mrb[0].mxu0
    %v205 = vadd.f32 %v115, %v204
    %v206 = vpop.f32.mrb[0].mxu0
    %v207 = vpop.f32.mrb[0].mxu0
    %v208 = vadd.f32 %v115, %v207
    %v209 = vpop.f32.mrb[0].mxu0
    %210 = vdwg.mxu0
    %v211 = vmul.f32 %v205, %v205
    %v212 = vmul.f32 %v208, %v208
    %v213 = vmul.f32 %v205, %v211
    %v214 = vmul.f32 %v208, %v212
    %v215 = vmul.f32 %v213, 0.044715
    %v216 = vmul.f32 %v214, 0.044715
    %v217 = vadd.f32 %v205, %v215
    %v218 = vadd.f32 %v208, %v216
    %v219 = vmul.f32 %v217, 0.7978846
    %v220 = vmul.f32 %v218, 0.7978846
    %v221 = vtanh.pop %v219
    %v222 = vtanh.pop %v220
    %v223 = vadd.f32 %v221, 1.0
    %v224 = vadd.f32 %v222, 1.0
    %v225 = vmul.f32 %v223, 0.5
    %v226 = vmul.f32 %v224, 0.5
    %v227 = vmul.f32 %v205, %v225
    %v228 = vmul.f32 %v208, %v226
    %v229 = vpack.c.bf16 %v228, %v227
    %v230 = vld [vmem:[#allocation8] sm:$0xf]
    %v231 = vld [vmem:[#allocation8 + $0x4] sm:$0xf]
    %v232 = vld [vmem:[#allocation8 + $0x8] sm:$0xf]
    %v233 = vld [vmem:[#allocation8 + $0xc] sm:$0xf]
    %v234 = vld [vmem:[#allocation8 + $0x10] sm:$0xf]
    %v235 = vld [vmem:[#allocation8 + $0x14] sm:$0xf]
    %v236 = vld [vmem:[#allocation8 + $0x18] sm:$0xf]
    %v237 = vld [vmem:[#allocation8 + $0x1c] sm:$0xf]
    %v238 = vld [vmem:[#allocation8 + $0x20] sm:$0xf]
    %v239 = vld [vmem:[#allocation8 + $0x24] sm:$0xf]
    %v240 = vld [vmem:[#allocation8 + $0x28] sm:$0xf]
    %v241 = vld [vmem:[#allocation8 + $0x2c] sm:$0xf]
    %v242 = vld [vmem:[#allocation8 + $0x30] sm:$0xf]
    %v243 = vld [vmem:[#allocation8 + $0x34] sm:$0xf]
    %v244 = vld [vmem:[#allocation8 + $0x38] sm:$0xf]
    %v245 = vld [vmem:[#allocation8 + $0x3c] sm:$0xf]
    %v246 = vld [vmem:[#allocation10] sm:$0x1]
    %v247 = vunpack.c.l.bf16 %v246
    %v248 = vlaneseq
    %v249 = vshrl.u32 %v248, 7
    %v250 = vsub.s32 0, %v249
    %v251 = vrot.slane %v247, %v250
    %v268 = vunpack.c.l.b16 %v230
    %v269 = vunpack.c.l.b16 %v231
    %v270 = vunpack.c.l.b16 %v232
    %v271 = vunpack.c.l.b16 %v233
    %v272 = vunpack.c.l.b16 %v234
    %v273 = vunpack.c.l.b16 %v235
    %v274 = vunpack.c.l.b16 %v236
    %v275 = vunpack.c.l.b16 %v237
    %v276 = vunpack.c.l.b16 %v238
    %v277 = vunpack.c.l.b16 %v239
    %v278 = vunpack.c.l.b16 %v240
    %v279 = vunpack.c.l.b16 %v241
    %v280 = vunpack.c.l.b16 %v242
    %v281 = vunpack.c.l.b16 %v243
    %v282 = vunpack.c.l.b16 %v244
    %v283 = vunpack.c.l.b16 %v245
    %v284 = vpack.c.b16 %v269, %v268
    %v285 = vpack.c.b16 %v271, %v270
    %v286 = vpack.c.b16 %v273, %v272
    %v287 = vpack.c.b16 %v275, %v274
    %v288 = vpack.c.b16 %v277, %v276
    %v289 = vpack.c.b16 %v279, %v278
    %v290 = vpack.c.b16 %v281, %v280
    %v291 = vpack.c.b16 %v283, %v282
    %300 = vmatprep.subr.bf16.mxu0 0
    %301 = vmatpush1.bf16.msra.mxu0 %v284
    %302 = vmatprep.subr.bf16.mxu0 0
    %303 = vmatpush1.bf16.msra.mxu0 %v285
    %304 = vmatprep.subr.bf16.mxu0 0
    %305 = vmatpush1.bf16.msra.mxu0 %v286
    %306 = vmatprep.subr.bf16.mxu0 0
    %307 = vmatpush1.bf16.msra.mxu0 %v287
    %308 = vmatprep.subr.bf16.mxu0 0
    %309 = vmatpush1.bf16.msra.mxu0 %v288
    %310 = vmatprep.subr.bf16.mxu0 0
    %311 = vmatpush1.bf16.msra.mxu0 %v289
    %312 = vmatprep.subr.bf16.mxu0 0
    %313 = vmatpush1.bf16.msra.mxu0 %v290
    %314 = vmatprep.subr.bf16.mxu0 0
    %315 = vmatpush1.bf16.msra.mxu0 %v291
    %316 = vmatprep.subr.bf16.mxu0 0
    %317 = vmatpush1.bf16.msra.mxu0 0
    %318 = vmatprep.subr.bf16.mxu0 0
    %319 = vmatpush1.bf16.msra.mxu0 0
    %320 = vmatprep.subr.bf16.mxu0 0
    %321 = vmatpush1.bf16.msra.mxu0 0
    %322 = vmatprep.subr.bf16.mxu0 0
    %323 = vmatpush1.bf16.msra.mxu0 0
    %324 = vmatprep.subr.bf16.mxu0 0
    %325 = vmatpush1.bf16.msra.mxu0 0
    %326 = vmatprep.subr.bf16.mxu0 0
    %327 = vmatpush1.bf16.msra.mxu0 0
    %328 = vmatprep.subr.bf16.mxu0 0
    %329 = vmatpush1.bf16.msra.mxu0 0
    %330 = vmatprep.subr.bf16.mxu0 0
    %331 = vmatpush1.bf16.msra.mxu0 0
    %332 = vmatprep.mubr.bf16.mxu0 0
    %333 = vmatmul.mubr.bf16.gmra.mrb[0].mxu0 %v229
    %v334 = vpop.f32.mrb[0].mxu0
    %v335 = vadd.f32 %v251, %v334
    %v336 = vpop.f32.mrb[0].mxu0
    %v337 = vpop.f32.mrb[0].mxu0
    %v338 = vadd.f32 %v251, %v337
    %v339 = vpop.f32.mrb[0].mxu0
    %340 = vdwg.mxu0
    %v341 = vadd.f32 %v92, %v335
    %v342 = vadd.f32 %v93, %v338
    %v343 = vpack.c.bf16 %v342, %v341
    %s344 = scalar_lea.vmem [#allocation5], 64
    %v345 = vld [vmem:[%s344] sm:$0xf]
    %v346 = vld [vmem:[%s344 + $0x4] sm:$0xf]
    %v347 = vld [vmem:[%s344 + $0x8] sm:$0xf]
    %v348 = vld [vmem:[%s344 + $0xc] sm:$0xf]
    %v349 = vld [vmem:[%s344 + $0x10] sm:$0xf]
    %v350 = vld [vmem:[%s344 + $0x14] sm:$0xf]
    %v351 = vld [vmem:[%s344 + $0x18] sm:$0xf]
    %v352 = vld [vmem:[%s344 + $0x1c] sm:$0xf]
    %v353 = vld [vmem:[%s344 + $0x20] sm:$0xf]
    %v354 = vld [vmem:[%s344 + $0x24] sm:$0xf]
    %v355 = vld [vmem:[%s344 + $0x28] sm:$0xf]
    %v356 = vld [vmem:[%s344 + $0x2c] sm:$0xf]
    %v357 = vld [vmem:[%s344 + $0x30] sm:$0xf]
    %v358 = vld [vmem:[%s344 + $0x34] sm:$0xf]
    %v359 = vld [vmem:[%s344 + $0x38] sm:$0xf]
    %v360 = vld [vmem:[%s344 + $0x3c] sm:$0xf]
    %s361 = scalar_lea.vmem [#allocation7], 1
    %v362 = vld [vmem:[%s361] sm:$0x1]
    %v363 = vunpack.c.l.bf16 %v362
    %v364 = vlaneseq
    %v365 = vshrl.u32 %v364, 7
    %v366 = vsub.s32 0, %v365
    %v367 = vrot.slane %v363, %v366
    %v384 = vunpack.c.l.b16 %v345
    %v385 = vunpack.c.l.b16 %v346
    %v386 = vunpack.c.l.b16 %v347
    %v387 = vunpack.c.l.b16 %v348
    %v388 = vunpack.c.l.b16 %v349
    %v389 = vunpack.c.l.b16 %v350
    %v390 = vunpack.c.l.b16 %v351
    %v391 = vunpack.c.l.b16 %v352
    %v392 = vunpack.c.l.b16 %v353
    %v393 = vunpack.c.l.b16 %v354
    %v394 = vunpack.c.l.b16 %v355
    %v395 = vunpack.c.l.b16 %v356
    %v396 = vunpack.c.l.b16 %v357
    %v397 = vunpack.c.l.b16 %v358
    %v398 = vunpack.c.l.b16 %v359
    %v399 = vunpack.c.l.b16 %v360
    %v400 = vpack.c.b16 %v385, %v384
    %v401 = vpack.c.b16 %v387, %v386
    %v402 = vpack.c.b16 %v389, %v388
    %v403 = vpack.c.b16 %v391, %v390
    %v404 = vpack.c.b16 %v393, %v392
    %v405 = vpack.c.b16 %v395, %v394
    %v406 = vpack.c.b16 %v397, %v396
    %v407 = vpack.c.b16 %v399, %v398
    %416 = vmatprep.subr.bf16.mxu0 0
    %417 = vmatpush1.bf16.msra.mxu0 %v400
    %418 = vmatprep.subr.bf16.mxu0 0
    %419 = vmatpush1.bf16.msra.mxu0 %v401
    %420 = vmatprep.subr.bf16.mxu0 0
    %421 = vmatpush1.bf16.msra.mxu0 %v402
    %422 = vmatprep.subr.bf16.mxu0 0
    %423 = vmatpush1.bf16.msra.mxu0 %v403
    %424 = vmatprep.subr.bf16.mxu0 0
    %425 = vmatpush1.bf16.msra.mxu0 %v404
    %426 = vmatprep.subr.bf16.mxu0 0
    %427 = vmatpush1.bf16.msra.mxu0 %v405
    %428 = vmatprep.subr.bf16.mxu0 0
    %429 = vmatpush1.bf16.msra.mxu0 %v406
    %430 = vmatprep.subr.bf16.mxu0 0
    %431 = vmatpush1.bf16.msra.mxu0 %v407
    %432 = vmatprep.subr.bf16.mxu0 0
    %433 = vmatpush1.bf16.msra.mxu0 0
    %434 = vmatprep.subr.bf16.mxu0 0
    %435 = vmatpush1.bf16.msra.mxu0 0
    %436 = vmatprep.subr.bf16.mxu0 0
    %437 = vmatpush1.bf16.msra.mxu0 0
    %438 = vmatprep.subr.bf16.mxu0 0
    %439 = vmatpush1.bf16.msra.mxu0 0
    %440 = vmatprep.subr.bf16.mxu0 0
    %441 = vmatpush1.bf16.msra.mxu0 0
    %442 = vmatprep.subr.bf16.mxu0 0
    %443 = vmatpush1.bf16.msra.mxu0 0
    %444 = vmatprep.subr.bf16.mxu0 0
    %445 = vmatpush1.bf16.msra.mxu0 0
    %446 = vmatprep.subr.bf16.mxu0 0
    %447 = vmatpush1.bf16.msra.mxu0 0
    %448 = vmatprep.mubr.bf16.mxu0 0
    %449 = vmatmul.mubr.bf16.gmra.mrb[0].mxu0 %v343
    %v450 = vpop.f32.mrb[0].mxu0
    %v451 = vadd.f32 %v367, %v450
    %v452 = vpop.f32.mrb[0].mxu0
    %v453 = vpop.f32.mrb[0].mxu0
    %v454 = vadd.f32 %v367, %v453
    %v455 = vpop.f32.mrb[0].mxu0
    %456 = vdwg.mxu0
    %v457 = vmul.f32 %v451, %v451
    %v458 = vmul.f32 %v454, %v454
    %v459 = vmul.f32 %v451, %v457
    %v460 = vmul.f32 %v454, %v458
    %v461 = vmul.f32 %v459, 0.044715
    %v462 = vmul.f32 %v460, 0.044715
    %v463 = vadd.f32 %v451, %v461
    %v464 = vadd.f32 %v454, %v462
    %v465 = vmul.f32 %v463, 0.7978846
    %v466 = vmul.f32 %v464, 0.7978846
    %v467 = vtanh.pop %v465
    %v468 = vtanh.pop %v466
    %v469 = vadd.f32 %v467, 1.0
    %v470 = vadd.f32 %v468, 1.0
    %v471 = vmul.f32 %v469, 0.5
    %v472 = vmul.f32 %v470, 0.5
    %v473 = vmul.f32 %v451, %v471
    %v474 = vmul.f32 %v454, %v472
    %v475 = vpack.c.bf16 %v474, %v473
    %s476 = scalar_lea.vmem [#allocation8], 64
    %v477 = vld [vmem:[%s476] sm:$0xf]
    %v478 = vld [vmem:[%s476 + $0x4] sm:$0xf]
    %v479 = vld [vmem:[%s476 + $0x8] sm:$0xf]
    %v480 = vld [vmem:[%s476 + $0xc] sm:$0xf]
    %v481 = vld [vmem:[%s476 + $0x10] sm:$0xf]
    %v482 = vld [vmem:[%s476 + $0x14] sm:$0xf]
    %v483 = vld [vmem:[%s476 + $0x18] sm:$0xf]
    %v484 = vld [vmem:[%s476 + $0x1c] sm:$0xf]
    %v485 = vld [vmem:[%s476 + $0x20] sm:$0xf]
    %v486 = vld [vmem:[%s476 + $0x24] sm:$0xf]
    %v487 = vld [vmem:[%s476 + $0x28] sm:$0xf]
    %v488 = vld [vmem:[%s476 + $0x2c] sm:$0xf]
    %v489 = vld [vmem:[%s476 + $0x30] sm:$0xf]
    %v490 = vld [vmem:[%s476 + $0x34] sm:$0xf]
    %v491 = vld [vmem:[%s476 + $0x38] sm:$0xf]
    %v492 = vld [vmem:[%s476 + $0x3c] sm:$0xf]
    %s493 = scalar_lea.vmem [#allocation10], 1
    %v494 = vld [vmem:[%s493] sm:$0x1]
    %v495 = vunpack.c.l.bf16 %v494
    %v496 = vlaneseq
    %v497 = vshrl.u32 %v496, 7
    %v498 = vsub.s32 0, %v497
    %v499 = vrot.slane %v495, %v498
    %v516 = vunpack.c.l.b16 %v477
    %v517 = vunpack.c.l.b16 %v478
    %v518 = vunpack.c.l.b16 %v479
    %v519 = vunpack.c.l.b16 %v480
    %v520 = vunpack.c.l.b16 %v481
    %v521 = vunpack.c.l.b16 %v482
    %v522 = vunpack.c.l.b16 %v483
    %v523 = vunpack.c.l.b16 %v484
    %v524 = vunpack.c.l.b16 %v485
    %v525 = vunpack.c.l.b16 %v486
    %v526 = vunpack.c.l.b16 %v487
    %v527 = vunpack.c.l.b16 %v488
    %v528 = vunpack.c.l.b16 %v489
    %v529 = vunpack.c.l.b16 %v490
    %v530 = vunpack.c.l.b16 %v491
    %v531 = vunpack.c.l.b16 %v492
    %v532 = vpack.c.b16 %v517, %v516
    %v533 = vpack.c.b16 %v519, %v518
    %v534 = vpack.c.b16 %v521, %v520
    %v535 = vpack.c.b16 %v523, %v522
    %v536 = vpack.c.b16 %v525, %v524
    %v537 = vpack.c.b16 %v527, %v526
    %v538 = vpack.c.b16 %v529, %v528
    %v539 = vpack.c.b16 %v531, %v530
    %548 = vmatprep.subr.bf16.mxu0 0
    %549 = vmatpush1.bf16.msra.mxu0 %v532
    %550 = vmatprep.subr.bf16.mxu0 0
    %551 = vmatpush1.bf16.msra.mxu0 %v533
    %552 = vmatprep.subr.bf16.mxu0 0
    %553 = vmatpush1.bf16.msra.mxu0 %v534
    %554 = vmatprep.subr.bf16.mxu0 0
    %555 = vmatpush1.bf16.msra.mxu0 %v535
    %556 = vmatprep.subr.bf16.mxu0 0
    %557 = vmatpush1.bf16.msra.mxu0 %v536
    %558 = vmatprep.subr.bf16.mxu0 0
    %559 = vmatpush1.bf16.msra.mxu0 %v537
    %560 = vmatprep.subr.bf16.mxu0 0
    %561 = vmatpush1.bf16.msra.mxu0 %v538
    %562 = vmatprep.subr.bf16.mxu0 0
    %563 = vmatpush1.bf16.msra.mxu0 %v539
    %564 = vmatprep.subr.bf16.mxu0 0
    %565 = vmatpush1.bf16.msra.mxu0 0
    %566 = vmatprep.subr.bf16.mxu0 0
    %567 = vmatpush1.bf16.msra.mxu0 0
    %568 = vmatprep.subr.bf16.mxu0 0
    %569 = vmatpush1.bf16.msra.mxu0 0
    %570 = vmatprep.subr.bf16.mxu0 0
    %571 = vmatpush1.bf16.msra.mxu0 0
    %572 = vmatprep.subr.bf16.mxu0 0
    %573 = vmatpush1.bf16.msra.mxu0 0
    %574 = vmatprep.subr.bf16.mxu0 0
    %575 = vmatpush1.bf16.msra.mxu0 0
    %576 = vmatprep.subr.bf16.mxu0 0
    %577 = vmatpush1.bf16.msra.mxu0 0
    %578 = vmatprep.subr.bf16.mxu0 0
    %579 = vmatpush1.bf16.msra.mxu0 0
    %580 = vmatprep.mubr.bf16.mxu0 0
    %581 = vmatmul.mubr.bf16.gmra.mrb[0].mxu0 %v475
    %v582 = vpop.f32.mrb[0].mxu0
    %v583 = vadd.f32 %v499, %v582
    %v584 = vpop.f32.mrb[0].mxu0
    %v585 = vpop.f32.mrb[0].mxu0
    %v586 = vadd.f32 %v499, %v585
    %v587 = vpop.f32.mrb[0].mxu0
    %588 = vdwg.mxu0
    %v589 = vadd.f32 %v341, %v583
    %v590 = vadd.f32 %v342, %v586
    %v591 = vpack.c.bf16 %v590, %v589
    %v593 = vunpack.c.l.b16 %v591
    %v594 = vunpack.c.h.b16 %v591
    %v595 = vpack.c.b16 %v593, %v593
    %v596 = vpack.c.b16 %v594, %v594
    %599 = vst [vmem:[#allocation11] sm:$0xf] %v595
    %600 = vst [vmem:[#allocation11 + $0x4] sm:$0xf] %v596
    // Predicated region
    $region42: #{sequential_sequence_forward.2} parent=1 // pred_check
      _
    $region43: #{sequential_sequence_forward.2} parent=1 // pred_check_branch
      %602 = sbr.rel (0) target = $region45
    $region44: #{sequential_sequence_forward.2} parent=1 // pred_region
      %s604 = ssub.s32 128, 128
      %605 = vsyncadd [#allocation4], %s604
      %s606 = sshll.u32 [#allocation11], 4
      %s607 = int_to_ptr.vmem [resolvable:$true] %s606
      %612 = dma.vmem_to_hbm [thread:$0]  %s607, 128, %s5, [#allocation4], 64, 64, 4
    $region45: #{sequential_sequence_forward.2} parent=1 // pred_fallthru
      _
    // Predicated region
    $region46: #{sequential_sequence_forward.2} parent=1 // pred_check
      _
    $region47: #{sequential_sequence_forward.2} parent=1 // pred_check_branch
      %614 = sbr.rel (0) target = $region49
    $region48: #{sequential_sequence_forward.2} parent=1 // pred_region
      %615 = dma.done [#allocation4], 128
    $region49: #{sequential_sequence_forward.2} parent=1 // pred_fallthru
      _
    %616 = vsyncpa [#allocation3], 1
    %617 = vsyncpa [#allocation6], 1
    %618 = vsyncpa [#allocation9], 1
    %619 = vsyncpa [#allocation4], 1

</llo_original>
